<compile_context>
chip_gen: v7x
topology: tpu7x:2x2x1
jax: 0.10.0
libtpu: 0.0.40
codegen_flags: <defaults>
</compile_context>

<pallas_src>
import jax
import jax.numpy as jnp
from jax.experimental import pallas as pl
from jax.experimental.pallas import tpu as pltpu

H = 128          # hidden width fixed by the module
OUTW = 128       # lane-dense padded output width (advantages in [:O], value at col OUTW-1)


def _round_up(x, m):
    return ((x + m - 1) // m) * m


# ---------------------------------------------------------------------------
# Parameter packing: one weight slab (bf16) + one bias slab (f32)
# ---------------------------------------------------------------------------
def pack_params(p, input_dim, output_dim, dtype=jnp.bfloat16):
    assert output_dim + 1 <= OUTW, "advantage width + value column must fit in 128 lanes"
    F_pad = _round_up(input_dim, 16)   # 16-aligned: bf16 sublane tile -> free static slices

    # Weight slab rows:
    #   [0, F_pad)                : w1   (cols 0:128)
    #   [F_pad, F_pad+H)          : w2   (cols 0:128)
    #   [F_pad+H, F_pad+2H)       : wv1 | wa1   (cols 0:256)
    #   [F_pad+2H, F_pad+3H)      : wv2 -> column OUTW-1 (value)
    #   [F_pad+3H, F_pad+4H)      : wa2 -> columns 0:O   (advantages)
    W = jnp.zeros((F_pad + 4 * H, 2 * H), jnp.float32)
    W = W.at[:input_dim, :H].set(p["w1"])
    r = F_pad
    W = W.at[r:r + H, :H].set(p["w2"]); r += H
    W = W.at[r:r + H, :H].set(p["wv1"])
    W = W.at[r:r + H, H:].set(p["wa1"]); r += H
    W = W.at[r:r + H, OUTW - 1:OUTW].set(p["wv2"])
    W = W.at[r + H:r + 2 * H, :output_dim].set(p["wa2"])
    W = W.astype(dtype)

    # Bias slab (kept in f32: elementwise math stays f32 on all chips)
    Bb = jnp.zeros((4, 2 * H), jnp.float32)
    Bb = Bb.at[0, :H].set(p["b1"][0])
    Bb = Bb.at[1, :H].set(p["b2"][0])
    Bb = Bb.at[2, :H].set(p["bv1"][0])
    Bb = Bb.at[2, H:].set(p["ba1"][0])
    Bb = Bb.at[3, :output_dim].set(p["ba2"][0])
    Bb = Bb.at[3, OUTW - 1].set(p["bv2"][0, 0])
    return W, Bb


# ---------------------------------------------------------------------------
# Batch-tile selection (VMEM-aware, keeps >=2 blocks for v7x megacore)
# ---------------------------------------------------------------------------
def _choose_tile_b(B, F_pad, streaming_budget_bytes=8 << 20):
    # Per-row VMEM cost of the streaming buffers:
    #   x: bf16, double buffered; q: bf16, double buffered;
    #   f32 activations h1 / feat / hva / out4 (worst-case live simultaneously).
    per_row = 2 * F_pad * 2 + 2 * OUTW * 2 + (H + H + 2 * H + OUTW) * 4
    tb = streaming_budget_bytes // per_row
    tb = min(tb, 2048)                                    # step overhead amortized well before this
    tb = min(tb, max(_round_up(pl.cdiv(B, 2), 16), 16))   # ensure nblk >= 2 when B allows
    return max(16, (tb // 16) * 16)                       # bf16 sublane tile -> multiple of 16


# ---------------------------------------------------------------------------
# Kernel
# ---------------------------------------------------------------------------
def _make_kernel(F_pad, O, TB, B_real, compute_dtype):
    r2 = F_pad            # start of w2
    r3 = F_pad + H        # start of fused head layer-1 weights
    r4 = F_pad + 2 * H    # start of fused head layer-2 weights (2H rows)

    def kernel(x_ref, w_ref, b_ref, q_ref, asum_ref):
        i = pl.program_id(0)
        cd = compute_dtype

        x = x_ref[...]                                               # (TB, F_pad) bf16 already

        # feature layer 1
        w1 = w_ref[0:F_pad, 0:H]
        b1 = b_ref[0:1, 0:H]
        h1 = jnp.maximum(
            jnp.dot(x, w1, preferred_element_type=jnp.float32) + b1, 0.0)

        # feature layer 2
        w2 = w_ref[r2:r2 + H, 0:H]
        b2 = b_ref[1:2, 0:H]
        feat = jnp.maximum(
            jnp.dot(h1.astype(cd), w2, preferred_element_type=jnp.float32) + b2, 0.0)

        # fused head layer 1: [wv1 | wa1]  -> (TB, 256)
        w3 = w_ref[r3:r3 + H, :]
        b3 = b_ref[2:3, :]
        hva = jnp.maximum(
            jnp.dot(feat.astype(cd), w3, preferred_element_type=jnp.float32) + b3, 0.0)

        # fused head layer 2 (block-diagonal): advantages in cols [0, O),
        # value in col OUTW-1, exact zeros elsewhere.
        w4 = w_ref[r4:r4 + 2 * H, 0:OUTW]
        b4 = b_ref[3:4, 0:OUTW]
        out4 = jnp.dot(hva.astype(cd), w4, preferred_element_type=jnp.float32) + b4

        values = out4[:, OUTW - 1:OUTW]                              # (TB, 1)

        # Partial advantage sum for the GLOBAL mean (mask non-advantage columns
        # and rows past the real batch -- the ragged last block reads garbage
        # there, which the wrapper's [:B] slice also discards for q).
        col = jax.lax.broadcasted_iota(jnp.int32, (TB, OUTW), 1)
        row = jax.lax.broadcasted_iota(jnp.int32, (TB, OUTW), 0) + i * TB
        adv_valid = (col < O) & (row < B_real)
        adv_sum = jnp.sum(jnp.where(adv_valid, out4, 0.0))           # f32 scalar

        # q_partial = values + advantages (global-mean subtraction happens in the
        # wrapper so batch blocks stay independent -> "parallel" grid is legal).
        q_ref[...] = (values + out4).astype(q_ref.dtype)             # bf16 writeback
        asum_ref[...] = adv_sum.reshape(1, 1, 1)

    return kernel


# ---------------------------------------------------------------------------
# Wrapper
# ---------------------------------------------------------------------------
def dueling_dqn_forward(state, w_slab, b_slab, input_dim, output_dim, tile_b=None):
    B, F = state.shape
    assert F == input_dim
    F_pad = _round_up(input_dim, 16)
    assert w_slab.shape == (F_pad + 4 * H, 2 * H)
    assert b_slab.shape == (4, 2 * H)
    cd = w_slab.dtype  # bf16

    if tile_b is None:
        tile_b = _choose_tile_b(B, F_pad)
    tile_b = max(16, _round_up(tile_b, 16))      # bf16 x/q tiles need 16-aligned rows
    nblk = pl.cdiv(B, tile_b)                    # ragged last block handled by Pallas

    # Feed x as bf16 (halves the input DMA).  No batch-dim pad; feature dim is
    # padded only when input_dim is not already 16-aligned.
    if F != F_pad:
        x_in = jnp.pad(state, ((0, 0), (0, F_pad - F))).astype(cd)
    elif state.dtype != cd:
        x_in = state.astype(cd)
    else:
        x_in = state

    kernel = _make_kernel(F_pad, output_dim, tile_b, B, cd)

    # TODO(synk): if xprof still shows exposed input DMA for very large input_dim,
    # add pipeline_mode=pl.Buffered(3) on the x BlockSpec only.
    q_out, adv_sums = pl.pallas_call(
        kernel,
        grid=(nblk,),
        in_specs=[
            pl.BlockSpec((tile_b, F_pad), lambda i: (i, 0)),
            pl.BlockSpec(w_slab.shape, lambda i: (0, 0)),   # weights stay VMEM-resident
            pl.BlockSpec(b_slab.shape, lambda i: (0, 0)),
        ],
        out_specs=[
            pl.BlockSpec((tile_b, OUTW), lambda i: (i, 0)),
            pl.BlockSpec((1, 1, 1), lambda i: (i, 0, 0)),
        ],
        out_shape=[
            jax.ShapeDtypeStruct((B, OUTW), jnp.bfloat16),
            jax.ShapeDtypeStruct((nblk, 1, 1), jnp.float32),
        ],
        compiler_params=pltpu.CompilerParams(
            dimension_semantics=("parallel",),
            vmem_limit_bytes=32 << 20),
    )(x_in, w_slab, b_slab)

    adv_mean = jnp.sum(adv_sums) / (B * output_dim)                  # global mean, f32
    return q_out[:B, :output_dim].astype(jnp.float32) - adv_mean


# ---------------------------------------------------------------------------
# Init + references
# ---------------------------------------------------------------------------
def init_params(key, input_dim, output_dim):
    """Deterministic init mimicking nn.Linear default (uniform +/- 1/sqrt(fan_in))."""
    def linear(k, fan_in, fan_out):
        kw, kb = jax.random.split(k)
        bound = 1.0 / jnp.sqrt(fan_in)
        w = jax.random.uniform(kw, (fan_in, fan_out), jnp.float32, -bound, bound)
        b = jax.random.uniform(kb, (1, fan_out), jnp.float32, -bound, bound)
        return w, b

    keys = jax.random.split(key, 6)
    w1, b1 = linear(keys[0], input_dim, H)
    w2, b2 = linear(keys[1], H, H)
    wv1, bv1 = linear(keys[2], H, H)
    wv2, bv2 = linear(keys[3], H, 1)
    wa1, ba1 = linear(keys[4], H, H)
    wa2, ba2 = linear(keys[5], H, output_dim)
    return dict(w1=w1, b1=b1, w2=w2, b2=b2,
                wv1=wv1, bv1=bv1, wv2=wv2, bv2=bv2,
                wa1=wa1, ba1=ba1, wa2=wa2, ba2=ba2)


def reference_forward(state, p):
    """Pure f32 reference matching the PyTorch module."""
    relu = lambda z: jnp.maximum(z, 0.0)
    feat = relu(relu(state @ p["w1"] + p["b1"]) @ p["w2"] + p["b2"])
    values = relu(feat @ p["wv1"] + p["bv1"]) @ p["wv2"] + p["bv2"]
    advantages = relu(feat @ p["wa1"] + p["ba1"]) @ p["wa2"] + p["ba2"]
    return values + (advantages - jnp.mean(advantages))


def reference_forward_quantized(state, p, cd=jnp.bfloat16):
    """Reference with the same bf16-in / f32-accumulate casting as the kernel."""
    relu = lambda z: jnp.maximum(z, 0.0)
    lin = lambda x, w, b: jnp.dot(x.astype(cd), w.astype(cd),
                                  preferred_element_type=jnp.float32) + b
    feat = relu(lin(relu(lin(state, p["w1"], p["b1"])), p["w2"], p["b2"]))
    values = lin(relu(lin(feat, p["wv1"], p["bv1"])), p["wv2"], p["bv2"])
    advantages = lin(relu(lin(feat, p["wa1"], p["ba1"])), p["wa2"], p["ba2"])
    return values + (advantages - jnp.mean(advantages))


if __name__ == "__main__":
    INPUT_DIM = 32
    OUTPUT_DIM = 8
    BATCH = 48          # -> tile_b=32, nblk=2: exercises the parallel grid AND the ragged last block

    key = jax.random.PRNGKey(0)
    k_params, k_state = jax.random.split(key)
    params = init_params(k_params, INPUT_DIM, OUTPUT_DIM)
    state = jax.random.normal(k_state, (BATCH, INPUT_DIM), jnp.float32)

    w_slab, b_slab = pack_params(params, INPUT_DIM, OUTPUT_DIM, dtype=jnp.bfloat16)

    qvals = dueling_dqn_forward(state, w_slab, b_slab, INPUT_DIM, OUTPUT_DIM)
    qvals = jax.block_until_ready(qvals)

    ref_q = jax.block_until_ready(reference_forward_quantized(state, params))
    ref_f = jax.block_until_ready(reference_forward(state, params))

    assert qvals.shape == (BATCH, OUTPUT_DIM)
    # Check vs. a reference using the same bf16-matmul / f32-accumulate scheme
    # (kernel additionally rounds q to bf16 before the global-mean subtraction).
    assert jnp.allclose(qvals, ref_q, atol=1e-2, rtol=1e-2)
    # Loose check vs. the pure-f32 module semantics (bf16 rounding only).
    assert jnp.allclose(qvals, ref_f, atol=5e-2, rtol=5e-2)

    print("KERNEL_OK")
</pallas_src>

<mosaic_0001>
module attributes {stable_mosaic.version = 11 : i64} {
  func.func @kernel(%arg0: i32, %arg1: memref<32x32xbf16, #tpu.memory_space<vmem>>, %arg2: memref<544x256xbf16, #tpu.memory_space<vmem>>, %arg3: memref<4x256xf32, #tpu.memory_space<vmem>>, %arg4: memref<32x128xbf16, #tpu.memory_space<vmem>>, %arg5: memref<1x1x1xf32, #tpu.memory_space<vmem>>) attributes {dimension_semantics = [#tpu.dimension_semantics<parallel>], iteration_bounds = array<i64: 2>, scalar_prefetch = 0 : i64, scratch_operands = 0 : i64, tpu.core_type = #tpu.core_type<tc>, window_params = [{transform_indices = @transform_0, window_bounds = array<i64: 32, 32>}, {pipeline_mode = #tpu.pipeline_mode<synchronous>, transform_indices = @transform_1, window_bounds = array<i64: 544, 256>}, {pipeline_mode = #tpu.pipeline_mode<synchronous>, transform_indices = @transform_2, window_bounds = array<i64: 4, 256>}, {transform_indices = @transform_3, window_bounds = array<i64: 32, 128>}, {transform_indices = @transform_4, window_bounds = array<i64: 1, 1, 1>}]} {
    %c0 = arith.constant 0 : index
    %c0_0 = arith.constant 0 : index
    %0 = vector.load %arg1[%c0, %c0_0] : memref<32x32xbf16, #tpu.memory_space<vmem>>, vector<32x32xbf16>
    %c0_1 = arith.constant 0 : index
    %c0_2 = arith.constant 0 : index
    %1 = vector.load %arg2[%c0_1, %c0_2] : memref<544x256xbf16, #tpu.memory_space<vmem>>, vector<32x128xbf16>
    %c0_3 = arith.constant 0 : index
    %c0_4 = arith.constant 0 : index
    %2 = vector.load %arg3[%c0_3, %c0_4] : memref<4x256xf32, #tpu.memory_space<vmem>>, vector<1x128xf32>
    %cst = arith.constant dense<0.000000e+00> : vector<32x128xf32>
    %3 = tpu.matmul %0, %1, %cst {dimension_numbers = #tpu.dot_dimension_numbers<[1], [0], [0], [1], [0, 0, 1, 1], [], []>} : vector<32x32xbf16>, vector<32x128xbf16>, vector<32x128xf32> -> vector<32x128xf32>
    %4 = vector.broadcast %2 : vector<1x128xf32> to vector<32x128xf32>
    %5 = arith.addf %3, %4 : vector<32x128xf32>
    %cst_5 = arith.constant 0.000000e+00 : f32
    %6 = vector.broadcast %cst_5 : f32 to vector<32x128xf32>
    %7 = arith.maximumf %5, %6 : vector<32x128xf32>
    %c32 = arith.constant 32 : index
    %c0_6 = arith.constant 0 : index
    %8 = vector.load %arg2[%c32, %c0_6] : memref<544x256xbf16, #tpu.memory_space<vmem>>, vector<128x128xbf16>
    %c1 = arith.constant 1 : index
    %c0_7 = arith.constant 0 : index
    %9 = vector.load %arg3[%c1, %c0_7] : memref<4x256xf32, #tpu.memory_space<vmem>>, vector<1x128xf32>
    %10 = arith.truncf %7 : vector<32x128xf32> to vector<32x128xbf16>
    %cst_8 = arith.constant dense<0.000000e+00> : vector<32x128xf32>
    %11 = tpu.matmul %10, %8, %cst_8 {dimension_numbers = #tpu.dot_dimension_numbers<[1], [0], [0], [1], [0, 0, 1, 1], [], []>} : vector<32x128xbf16>, vector<128x128xbf16>, vector<32x128xf32> -> vector<32x128xf32>
    %12 = vector.broadcast %9 : vector<1x128xf32> to vector<32x128xf32>
    %13 = arith.addf %11, %12 : vector<32x128xf32>
    %cst_9 = arith.constant 0.000000e+00 : f32
    %14 = vector.broadcast %cst_9 : f32 to vector<32x128xf32>
    %15 = arith.maximumf %13, %14 : vector<32x128xf32>
    %c160 = arith.constant 160 : index
    %c0_10 = arith.constant 0 : index
    %16 = vector.load %arg2[%c160, %c0_10] : memref<544x256xbf16, #tpu.memory_space<vmem>>, vector<128x256xbf16>
    %c2 = arith.constant 2 : index
    %c0_11 = arith.constant 0 : index
    %17 = vector.load %arg3[%c2, %c0_11] : memref<4x256xf32, #tpu.memory_space<vmem>>, vector<1x256xf32>
    %18 = arith.truncf %15 : vector<32x128xf32> to vector<32x128xbf16>
    %cst_12 = arith.constant dense<0.000000e+00> : vector<32x256xf32>
    %19 = tpu.matmul %18, %16, %cst_12 {dimension_numbers = #tpu.dot_dimension_numbers<[1], [0], [0], [1], [0, 0, 1, 1], [], []>} : vector<32x128xbf16>, vector<128x256xbf16>, vector<32x256xf32> -> vector<32x256xf32>
    %20 = vector.broadcast %17 : vector<1x256xf32> to vector<32x256xf32>
    %21 = arith.addf %19, %20 : vector<32x256xf32>
    %cst_13 = arith.constant 0.000000e+00 : f32
    %22 = vector.broadcast %cst_13 : f32 to vector<32x256xf32>
    %23 = arith.maximumf %21, %22 : vector<32x256xf32>
    %c288 = arith.constant 288 : index
    %c0_14 = arith.constant 0 : index
    %24 = vector.load %arg2[%c288, %c0_14] : memref<544x256xbf16, #tpu.memory_space<vmem>>, vector<256x128xbf16>
    %c3 = arith.constant 3 : index
    %c0_15 = arith.constant 0 : index
    %25 = vector.load %arg3[%c3, %c0_15] : memref<4x256xf32, #tpu.memory_space<vmem>>, vector<1x128xf32>
    %26 = arith.truncf %23 : vector<32x256xf32> to vector<32x256xbf16>
    %cst_16 = arith.constant dense<0.000000e+00> : vector<32x128xf32>
    %27 = tpu.matmul %26, %24, %cst_16 {dimension_numbers = #tpu.dot_dimension_numbers<[1], [0], [0], [1], [0, 0, 1, 1], [], []>} : vector<32x256xbf16>, vector<256x128xbf16>, vector<32x128xf32> -> vector<32x128xf32>
    %28 = vector.broadcast %25 : vector<1x128xf32> to vector<32x128xf32>
    %29 = arith.addf %27, %28 : vector<32x128xf32>
    %30 = vector.extract_strided_slice %29 {offsets = [0, 127], sizes = [32, 1], strides = [1, 1]} : vector<32x128xf32> to vector<32x1xf32>
    %31 = tpu.iota {dimensions = array<i32: 1>} : vector<32x128xi32>
    %32 = tpu.iota {dimensions = array<i32: 0>} : vector<32x128xi32>
    %c32_i32 = arith.constant 32 : i32
    %33 = arith.muli %arg0, %c32_i32 : i32
    %34 = vector.broadcast %33 : i32 to vector<32x128xi32>
    %35 = arith.addi %32, %34 : vector<32x128xi32>
    %c8_i32 = arith.constant 8 : i32
    %36 = vector.broadcast %c8_i32 : i32 to vector<32x128xi32>
    %37 = arith.cmpi slt, %31, %36 : vector<32x128xi32>
    %c48_i32 = arith.constant 48 : i32
    %38 = vector.broadcast %c48_i32 : i32 to vector<32x128xi32>
    %39 = arith.cmpi slt, %35, %38 : vector<32x128xi32>
    %40 = arith.andi %37, %39 : vector<32x128xi1>
    %cst_17 = arith.constant 0.000000e+00 : f32
    %41 = vector.broadcast %cst_17 : f32 to vector<32x128xf32>
    %42 = arith.select %40, %29, %41 : vector<32x128xi1>, vector<32x128xf32>
    %43 = vector.shape_cast %42 : vector<32x128xf32> to vector<1x32x128xf32>
    %cst_18 = arith.constant dense<0.000000e+00> : vector<1xf32>
    %44 = vector.multi_reduction <add>, %43, %cst_18 [1, 2] : vector<1x32x128xf32> to vector<1xf32>
    %45 = vector.shape_cast %44 : vector<1xf32> to vector<1x1x1xf32>
    %46 = vector.extract %45[0, 0, 0] : f32 from vector<1x1x1xf32>
    %47 = vector.broadcast %30 : vector<32x1xf32> to vector<32x128xf32>
    %48 = arith.addf %47, %29 : vector<32x128xf32>
    %49 = arith.truncf %48 : vector<32x128xf32> to vector<32x128xbf16>
    %c0_19 = arith.constant 0 : index
    %c0_20 = arith.constant 0 : index
    %50 = vector.load %arg4[%c0_19, %c0_20] : memref<32x128xbf16, #tpu.memory_space<vmem>>, vector<32x128xbf16>
    tpu.vector_store %arg4[%c0_19, %c0_20], %49 {strides = array<i32>} : memref<32x128xbf16, #tpu.memory_space<vmem>>, vector<32x128xbf16>,
    %51 = vector.broadcast %46 : f32 to vector<1x1x1xf32>
    %c0_21 = arith.constant 0 : index
    %c0_22 = arith.constant 0 : index
    %c0_23 = arith.constant 0 : index
    %52 = vector.load %arg5[%c0_21, %c0_22, %c0_23] : memref<1x1x1xf32, #tpu.memory_space<vmem>>, vector<1x1x1xf32>
    tpu.vector_store %arg5[%c0_21, %c0_22, %c0_23], %51 {strides = array<i32>} : memref<1x1x1xf32, #tpu.memory_space<vmem>>, vector<1x1x1xf32>,
    return
  }
  func.func @transform_0(%arg0: i32) -> (i32, i32) {
    %c0_i32 = arith.constant 0 : i32
    %c0_i32_0 = arith.constant 0 : i32
    return %arg0, %c0_i32 : i32, i32
  }
  func.func @transform_1(%arg0: i32) -> (i32, i32) {
    %c0_i32 = arith.constant 0 : i32
    %c0_i32_0 = arith.constant 0 : i32
    %c0_i32_1 = arith.constant 0 : i32
    return %c0_i32, %c0_i32_0 : i32, i32
  }
  func.func @transform_2(%arg0: i32) -> (i32, i32) {
    %c0_i32 = arith.constant 0 : i32
    %c0_i32_0 = arith.constant 0 : i32
    %c0_i32_1 = arith.constant 0 : i32
    return %c0_i32, %c0_i32_0 : i32, i32
  }
  func.func @transform_3(%arg0: i32) -> (i32, i32) {
    %c0_i32 = arith.constant 0 : i32
    %c0_i32_0 = arith.constant 0 : i32
    return %arg0, %c0_i32 : i32, i32
  }
  func.func @transform_4(%arg0: i32) -> (i32, i32, i32) {
    %c0_i32 = arith.constant 0 : i32
    %c0_i32_0 = arith.constant 0 : i32
    %c0_i32_1 = arith.constant 0 : i32
    return %arg0, %c0_i32, %c0_i32_0 : i32, i32, i32
  }
}

</mosaic_0001>

<llo_original>
// kernel: tpu_custom_call.1
$region0: #{tpu_custom_call.1}
  #allocation0 [shape = 'u32[]', space=smem, size = 0x4, offset = 0x4, fixed_abs, tag = 'smem constant byte address 0x4 - core index']
  #allocation1 [shape = 'u32[144,128]{1,0:T(1,128)}', space=vmem, size = 0x12000, scoped, tag = 'internal scratch']
  %s0 = inlined_call_operand.vmem [shape: bf16[48,32], index: 0, kind: input, shape index: {}]
  %s1 = inlined_call_operand.hbm [shape: bf16[544,256], index: 1, kind: input, shape index: {}]
  %s2 = inlined_call_operand.vmem [shape: f32[4,256], index: 2, kind: input, shape index: {}]
  %s3 = inlined_call_operand.hbm [shape: bf16[48,128], index: 3, kind: output, shape index: {0}]
  %s4 = inlined_call_operand.vmem [shape: f32[2,1,1], index: 4, kind: output, shape index: {1}]
  %5 = xla_tuple %s3, %s4
  %s6 = sld [smem:[#allocation0]]
  $region57: #{tpu_custom_call.1} parent=0
    _
  %s8 = ssub.s32 1, %s6
  %s9 = scalar_select 0, %s8, %s6
  $region1: #{tpu_custom_call.1} parent=0
    #allocation2 [shape = 'u8[278528]{0}', space=vmem, size = 0x44000, scoped, tag = 'input window, operand 1, single buffered']
    #allocation3 [shape = 's32[2]{0}', space=sflag, size = 0x8, scoped, tag = 'scoped memory for tpu_custom_call.1']
    #allocation4 [shape = 's32[2]{0}', space=sflag, size = 0x8, scoped, tag = 'scoped memory for tpu_custom_call.1']
    #allocation5 [shape = 'u8[16384]{0}', space=vmem, size = 0x4000, scoped, tag = 'output window, operand 0']
    %10 = vsyncpa [#allocation3], 0
    %11 = vsyncpa [#allocation4], 0
    %s12 = scalar_lea.sflag [#allocation4], 1
    %13 = vsyncpa %s12, 0
    loop: start=0, step=1, limit=4
    $region2: #{tpu_custom_call.1} parent=1 // loop_pre_header
      _
    $region3: #{tpu_custom_call.1} parent=1 // loop_header
      %s15 = sphi 0, %s19
      %p16 = scmp.ge.s32.totalorder %s15, 4
      %s25 = sphi 0, %s27
      %s28 = sphi 0, %s25
      %s29 = sphi 0, %s28
      %s45 = sphi 0, %s29
      %s49 = sphi 0, %s49
      %s51 = sphi 0, %s49
      %s52 = sphi 0, %s51
      %s66 = sphi 0, %s52
      %s70 = sphi 0, %s70
      %s72 = sphi 0, %s70
      %s73 = sphi 0, %s72
      %s87 = sphi 0, %s73
      %s93 = sphi 0, %s95
      %s96 = sphi 0, %s93
      %s97 = sphi 0, %s96
      %s113 = sphi 0, %s97
      %s119 = sphi 0, %s121
      %s122 = sphi 0, %s119
      %s123 = sphi 0, %s122
      %s139 = sphi 0, %s123
    $region4: #{tpu_custom_call.1} parent=1 // loop_header_branch
      %18 = sbr.rel (%p16) target = $region8
    $region5: #{tpu_custom_call.1} parent=1 // loop_body
      %s20 = ssub.s32 %s15, 1
      %s21 = ssub.s32 %s15, 2
      %s22 = sadd.s32 %s15, 1
      %s23 = ssub.s32 %s15, %s22
      %p24 = scmp.eq.s32.totalorder %s23, 0
      %s26 = sadd.s32 %s25, 1
      %s27 = scalar_select %p24, %s25, %s26
      %p30 = pneg %p24
      %p31 = scmp.eq.s32.totalorder %s15, 1
      %p32 = por %p30, %p31
      %p33 = scmp.ne.s32.totalorder %s25, %s28
      %p34 = scmp.eq.s32.totalorder %s15, 0
      %p35 = por %p33, %p34
      %p36 = scmp.ne.s32.totalorder %s25, %s28
      %p37 = scmp.eq.s32.totalorder %s20, 1
      %p38 = por %p36, %p37
      %p39 = scmp.ne.s32.totalorder %s28, %s29
      %p40 = scmp.eq.s32.totalorder %s20, 0
      %p41 = por %p39, %p40
      %p42 = scmp.ne.s32.totalorder %s28, %s29
      %p43 = scmp.eq.s32.totalorder %s21, 1
      %p44 = por %p42, %p43
      %p46 = scmp.ne.s32.totalorder %s29, %s45
      %p47 = scmp.eq.s32.totalorder %s21, 0
      %p48 = por %p46, %p47
      %s50 = sadd.s32 %s49, 1
      %p53 = scmp.eq.s32.totalorder %s15, 1
      %p54 = scmp.ne.s32.totalorder %s49, %s51
      %p55 = scmp.eq.s32.totalorder %s15, 0
      %p56 = por %p54, %p55
      %p57 = scmp.ne.s32.totalorder %s49, %s51
      %p58 = scmp.eq.s32.totalorder %s20, 1
      %p59 = por %p57, %p58
      %p60 = scmp.ne.s32.totalorder %s51, %s52
      %p61 = scmp.eq.s32.totalorder %s20, 0
      %p62 = por %p60, %p61
      %p63 = scmp.ne.s32.totalorder %s51, %s52
      %p64 = scmp.eq.s32.totalorder %s21, 1
      %p65 = por %p63, %p64
      %p67 = scmp.ne.s32.totalorder %s52, %s66
      %p68 = scmp.eq.s32.totalorder %s21, 0
      %p69 = por %p67, %p68
      %s71 = sadd.s32 %s70, 1
      %p74 = scmp.eq.s32.totalorder %s15, 1
      %p75 = scmp.ne.s32.totalorder %s70, %s72
      %p76 = scmp.eq.s32.totalorder %s15, 0
      %p77 = por %p75, %p76
      %p78 = scmp.ne.s32.totalorder %s70, %s72
      %p79 = scmp.eq.s32.totalorder %s20, 1
      %p80 = por %p78, %p79
      %p81 = scmp.ne.s32.totalorder %s72, %s73
      %p82 = scmp.eq.s32.totalorder %s20, 0
      %p83 = por %p81, %p82
      %p84 = scmp.ne.s32.totalorder %s72, %s73
      %p85 = scmp.eq.s32.totalorder %s21, 1
      %p86 = por %p84, %p85
      %p88 = scmp.ne.s32.totalorder %s73, %s87
      %p89 = scmp.eq.s32.totalorder %s21, 0
      %p90 = por %p88, %p89
      %s91 = ssub.s32 %s15, %s22
      %p92 = scmp.eq.s32.totalorder %s91, 0
      %s94 = sadd.s32 %s93, 1
      %s95 = scalar_select %p92, %s93, %s94
      %p98 = pneg %p92
      %p99 = scmp.eq.s32.totalorder %s15, 1
      %p100 = por %p98, %p99
      %p101 = scmp.ne.s32.totalorder %s93, %s96
      %p102 = scmp.eq.s32.totalorder %s15, 0
      %p103 = por %p101, %p102
      %p104 = scmp.ne.s32.totalorder %s93, %s96
      %p105 = scmp.eq.s32.totalorder %s20, 1
      %p106 = por %p104, %p105
      %p107 = scmp.ne.s32.totalorder %s96, %s97
      %p108 = scmp.eq.s32.totalorder %s20, 0
      %p109 = por %p107, %p108
      %p110 = scmp.ne.s32.totalorder %s96, %s97
      %p111 = scmp.eq.s32.totalorder %s21, 1
      %p112 = por %p110, %p111
      %p114 = scmp.ne.s32.totalorder %s97, %s113
      %p115 = scmp.eq.s32.totalorder %s21, 0
      %p116 = por %p114, %p115
      %s117 = ssub.s32 %s15, %s22
      %p118 = scmp.eq.s32.totalorder %s117, 0
      %s120 = sadd.s32 %s119, 1
      %s121 = scalar_select %p118, %s119, %s120
      %p124 = pneg %p118
      %p125 = scmp.eq.s32.totalorder %s15, 1
      %p126 = por %p124, %p125
      %p127 = scmp.ne.s32.totalorder %s119, %s122
      %p128 = scmp.eq.s32.totalorder %s15, 0
      %p129 = por %p127, %p128
      %p130 = scmp.ne.s32.totalorder %s119, %s122
      %p131 = scmp.eq.s32.totalorder %s20, 1
      %p132 = por %p130, %p131
      %p133 = scmp.ne.s32.totalorder %s122, %s123
      %p134 = scmp.eq.s32.totalorder %s20, 0
      %p135 = por %p133, %p134
      %p136 = scmp.ne.s32.totalorder %s122, %s123
      %p137 = scmp.eq.s32.totalorder %s21, 1
      %p138 = por %p136, %p137
      %p140 = scmp.ne.s32.totalorder %s123, %s139
      %p141 = scmp.eq.s32.totalorder %s21, 0
      %p142 = por %p140, %p141
      %p143 = scmp.le.s32.totalorder 1, %s15
      %p144 = scmp.lt.s32.totalorder %s15, 3
      %p145 = pnand %p143, %p144
      %p146 = pneg %p145
      // Predicated region
      $region9: #{tpu_custom_call.1} parent=5 // pred_check
        _
      $region10: #{tpu_custom_call.1} parent=5 // pred_check_branch
        %148 = sbr.rel (%p145) target = $region12
      $region11: #{tpu_custom_call.1} parent=5 // pred_region
        %s149 = ssub.s32 %s15, 1
        // Predicated region
        $region13: #{tpu_custom_call.1} parent=11 // pred_check
          %p150 = pneg %p62
        $region14: #{tpu_custom_call.1} parent=11 // pred_check_branch
          %152 = sbr.rel (%p150) target = $region16
        $region15: #{tpu_custom_call.1} parent=11 // pred_region
          %s154 = ssub.s32 8704, 8704
          %155 = vsyncadd [#allocation3], %s154
          %s156 = sshll.u32 [#allocation2], 4
          %s157 = int_to_ptr.vmem [resolvable:$true] %s156
          %162 = dma.hbm_to_vmem [thread:$0]  %s1, 8704, %s157, [#allocation3], 128, 128, 8
        $region16: #{tpu_custom_call.1} parent=11 // pred_fallthru
          _
        // Predicated region
        $region17: #{tpu_custom_call.1} parent=11 // pred_check
          %p163 = pneg %p83
        $region18: #{tpu_custom_call.1} parent=11 // pred_check_branch
          %165 = sbr.rel (%p163) target = $region20
        $region19: #{tpu_custom_call.1} parent=11 // pred_region
          _
        $region20: #{tpu_custom_call.1} parent=11 // pred_fallthru
          _
      $region12: #{tpu_custom_call.1} parent=5 // pred_fallthru
        _
      %p166 = scmp.lt.s32.totalorder %s15, 2
      // Predicated region
      $region21: #{tpu_custom_call.1} parent=5 // pred_check
        %p167 = pneg %p166
      $region22: #{tpu_custom_call.1} parent=5 // pred_check_branch
        %169 = sbr.rel (%p167) target = $region24
      $region23: #{tpu_custom_call.1} parent=5 // pred_region
        // Predicated region
        $region25: #{tpu_custom_call.1} parent=23 // pred_check
          %p170 = pneg %p35
        $region26: #{tpu_custom_call.1} parent=23 // pred_check_branch
          %172 = sbr.rel (%p170) target = $region28
        $region27: #{tpu_custom_call.1} parent=23 // pred_region
          %s173 = smul.u32 4, %s15
          %s174 = ssub.s32 6, %s173
          %p175 = scmp.lt.s32.totalorder %s174, 4
          %s176 = scalar_select %p175, %s174, 4
          %s177 = smul.u32 64, %s176
          %p178 = scmp.lt.s32.totalorder %s173, 5
          %s179 = scalar_select %p178, %s173, 5
          %s180 = smul.addr %s179, 4
          %s181 = scalar_lea.vmem %s0, %s180
          %s182 = smul.u32 4, %s15
          %s183 = ssub.s32 6, %s182
          %p184 = scmp.lt.s32.totalorder %s183, 4
          %s185 = scalar_select %p184, %s183, 4
          %s186 = smul.u32 64, %s185
        $region28: #{tpu_custom_call.1} parent=23 // pred_fallthru
          _
      $region24: #{tpu_custom_call.1} parent=5 // pred_fallthru
        _
      %p187 = scmp.le.s32.totalorder 1, %s15
      %p188 = scmp.lt.s32.totalorder %s15, 3
      %p189 = pnand %p187, %p188
      %p190 = pneg %p189
      // Predicated region
      $region29: #{tpu_custom_call.1} parent=5 // pred_check
        _
      $region30: #{tpu_custom_call.1} parent=5 // pred_check_branch
        %192 = sbr.rel (%p189) target = $region32
      $region31: #{tpu_custom_call.1} parent=5 // pred_region
        %s193 = ssub.s32 %s15, 1
        // Predicated region
        $region33: #{tpu_custom_call.1} parent=31 // pred_check
          %p194 = pneg %p62
        $region34: #{tpu_custom_call.1} parent=31 // pred_check_branch
          %196 = sbr.rel (%p194) target = $region36
        $region35: #{tpu_custom_call.1} parent=31 // pred_region
          %197 = dma.done [#allocation3], 8704
        $region36: #{tpu_custom_call.1} parent=31 // pred_fallthru
          _
        %s198 = smul.u32 4, %s20
        %s199 = ssub.s32 6, %s198
        %p200 = scmp.lt.s32.totalorder %s199, 4
        %s201 = scalar_select %p200, %s199, 4
        %s202 = smul.u32 64, %s201
        %p203 = scmp.lt.s32.totalorder %s198, 5
        %s204 = scalar_select %p203, %s198, 5
        %s205 = smul.addr %s204, 4
        %s206 = scalar_lea.vmem %s0, %s205
        %p207 = pneg %p41
        %p208 = pneg %p38
        %p209 = pneg %p62
        %p210 = pneg %p59
        %p211 = pneg %p83
        %p212 = pneg %p80
        %p213 = pneg %p109
        %p214 = pneg %p106
        %s215 = sand.u32 %s96, 1
        %s216 = scalar_lea.sflag [#allocation4], %s215
        %s217 = sand.u32 %s96, 1
        %s218 = smul.addr %s217, 16
        %s219 = scalar_lea.vmem [#allocation5], %s218
        %p220 = pneg %p135
        %p221 = pneg %p132
        %p222 = scmp.lt.s32.totalorder %s20, 1
        %s223 = scalar_select %p222, %s20, 1
        %s224 = scalar_lea.vmem %s4, %s223
        %s225 = smul.u32 4, %s20
        %s226 = ssub.s32 6, %s225
        %p227 = scmp.lt.s32.totalorder %s226, 4
        %s228 = scalar_select %p227, %s226, 4
        %s229 = smul.u32 64, %s228
        %p230 = scmp.lt.s32.totalorder %s225, 5
        %s231 = scalar_select %p230, %s225, 5
        %s232 = smul.addr %s231, 4
        %s233 = scalar_lea.vmem %s0, %s232
        %s234 = smul.u32 4, %s20
        %s235 = ssub.s32 6, %s234
        %p236 = scmp.lt.s32.totalorder %s235, 4
        %s237 = scalar_select %p236, %s235, 4
        %s238 = smul.u32 64, %s237
        %s239 = smul.u32 4, %s20
        %s240 = ssub.s32 6, %s239
        %p241 = scmp.lt.s32.totalorder %s240, 4
        %s242 = scalar_select %p241, %s240, 4
        %s243 = smul.u32 64, %s242
        %p244 = scmp.lt.s32.totalorder %s20, 1
        %s245 = scalar_select %p244, %s20, 1
        %s246 = scalar_lea.vmem %s4, %s245
        %v248 = vld [vmem:[%s233] sm:$0xf]
        %v249 = vld [vmem:[%s233 + $0x4] sm:$0xf]
        %v250 = vld [vmem:[%s233 + $0x8] sm:$0xf]
        %v251 = vld [vmem:[%s233 + $0xc] sm:$0xf]
        %v252 = vld [vmem:[#allocation2] sm:$0xf]
        %v253 = vld [vmem:[#allocation2 + $0x8] sm:$0xf]
        %v254 = vld [vmem:[#allocation2 + $0x10] sm:$0xf]
        %v255 = vld [vmem:[#allocation2 + $0x18] sm:$0xf]
        %v256 = vld [vmem:[%s2] sm:$0x1]
        %v257 = vlaneseq
        %v258 = vshrl.u32 %v257, 7
        %v259 = vsub.s32 0, %v258
        %v260 = vrot.slane %v256, %v259
        %v265 = vunpack.c.l.b16 %v248
        %v266 = vunpack.c.l.b16 %v249
        %v267 = vunpack.c.l.b16 %v250
        %v268 = vunpack.c.l.b16 %v251
        %v269 = vpack.c.b16 %v266, %v265
        %v270 = vpack.c.b16 %v268, %v267
        %v275 = vunpack.c.l.b16 %v252
        %v276 = vunpack.c.l.b16 %v253
        %v277 = vunpack.c.l.b16 %v254
        %v278 = vunpack.c.l.b16 %v255
        %v279 = vpack.c.b16 %v276, %v275
        %v280 = vpack.c.b16 %v278, %v277
        %vm283 = vcmask 261120
        %v285 = vsel %vm283, %v269, 0
        %v288 = vsel %vm283, %v270, 0
        %290 = vmatprep.subr.bf16.mxu0 0
        %291 = vmatpush1.bf16.msra.mxu0 %v279
        %292 = vmatprep.subr.bf16.mxu0 0
        %293 = vmatpush1.bf16.msra.mxu0 %v280
        %294 = vmatprep.subr.bf16.mxu0 0
        %295 = vmatpush1.bf16.msra.mxu0 0
        %296 = vmatprep.subr.bf16.mxu0 0
        %297 = vmatpush1.bf16.msra.mxu0 0
        %298 = vmatprep.subr.bf16.mxu0 0
        %299 = vmatpush1.bf16.msra.mxu0 0
        %300 = vmatprep.subr.bf16.mxu0 0
        %301 = vmatpush1.bf16.msra.mxu0 0
        %302 = vmatprep.subr.bf16.mxu0 0
        %303 = vmatpush1.bf16.msra.mxu0 0
        %304 = vmatprep.subr.bf16.mxu0 0
        %305 = vmatpush1.bf16.msra.mxu0 0
        %306 = vmatprep.subr.bf16.mxu0 0
        %307 = vmatpush1.bf16.msra.mxu0 0
        %308 = vmatprep.subr.bf16.mxu0 0
        %309 = vmatpush1.bf16.msra.mxu0 0
        %310 = vmatprep.subr.bf16.mxu0 0
        %311 = vmatpush1.bf16.msra.mxu0 0
        %312 = vmatprep.subr.bf16.mxu0 0
        %313 = vmatpush1.bf16.msra.mxu0 0
        %314 = vmatprep.subr.bf16.mxu0 0
        %315 = vmatpush1.bf16.msra.mxu0 0
        %316 = vmatprep.subr.bf16.mxu0 0
        %317 = vmatpush1.bf16.msra.mxu0 0
        %318 = vmatprep.subr.bf16.mxu0 0
        %319 = vmatpush1.bf16.msra.mxu0 0
        %320 = vmatprep.subr.bf16.mxu0 0
        %321 = vmatpush1.bf16.msra.mxu0 0
        %322 = vmatprep.mubr.bf16.mxu0 0
        %323 = vmatmul.mubr.bf16.gmra.mrb[0].mxu0 %v285
        %v324 = vpop.f32.mrb[0].mxu0
        %v325 = vadd.f32 %v260, %v324
        %v326 = vpop.f32.mrb[0].mxu0
        %v327 = vpop.f32.mrb[0].mxu0
        %v328 = vadd.f32 %v260, %v327
        %v329 = vpop.f32.mrb[0].mxu0
        %330 = vmatprep.mubr.bf16.mxu0 0
        %331 = vmatmul.mubr.bf16.gmra.mrb[0].mxu0 %v288
        %v332 = vpop.f32.mrb[0].mxu0
        %v333 = vadd.f32 %v260, %v332
        %v334 = vpop.f32.mrb[0].mxu0
        %v335 = vpop.f32.mrb[0].mxu0
        %v336 = vadd.f32 %v260, %v335
        %v337 = vpop.f32.mrb[0].mxu0
        %338 = vdwg.mxu0
        %v339 = vmax.f32 %v325, 0.0
        %v340 = vmax.f32 %v328, 0.0
        %v341 = vmax.f32 %v333, 0.0
        %v342 = vmax.f32 %v336, 0.0
        %v343 = vld [vmem:[#allocation2 + $0x20] sm:$0xf]
        %v344 = vld [vmem:[#allocation2 + $0x28] sm:$0xf]
        %v345 = vld [vmem:[#allocation2 + $0x30] sm:$0xf]
        %v346 = vld [vmem:[#allocation2 + $0x38] sm:$0xf]
        %v347 = vld [vmem:[#allocation2 + $0x40] sm:$0xf]
        %v348 = vld [vmem:[#allocation2 + $0x48] sm:$0xf]
        %v349 = vld [vmem:[#allocation2 + $0x50] sm:$0xf]
        %v350 = vld [vmem:[#allocation2 + $0x58] sm:$0xf]
        %v351 = vld [vmem:[#allocation2 + $0x60] sm:$0xf]
        %v352 = vld [vmem:[#allocation2 + $0x68] sm:$0xf]
        %v353 = vld [vmem:[#allocation2 + $0x70] sm:$0xf]
        %v354 = vld [vmem:[#allocation2 + $0x78] sm:$0xf]
        %v355 = vld [vmem:[#allocation2 + $0x80] sm:$0xf]
        %v356 = vld [vmem:[#allocation2 + $0x88] sm:$0xf]
        %v357 = vld [vmem:[#allocation2 + $0x90] sm:$0xf]
        %v358 = vld [vmem:[#allocation2 + $0x98] sm:$0xf]
        %v359 = vld [vmem:[%s2 + $0x1] sm:$0x1]
        %v360 = vpack.c.bf16 %v340, %v339
        %v361 = vpack.c.bf16 %v342, %v341
        %v362 = vlaneseq
        %v363 = vshrl.u32 %v362, 7
        %v364 = vsub.s32 0, %v363
        %v365 = vrot.slane %v359, %v364
        %v382 = vunpack.c.l.b16 %v343
        %v383 = vunpack.c.l.b16 %v344
        %v384 = vunpack.c.l.b16 %v345
        %v385 = vunpack.c.l.b16 %v346
        %v386 = vunpack.c.l.b16 %v347
        %v387 = vunpack.c.l.b16 %v348
        %v388 = vunpack.c.l.b16 %v349
        %v389 = vunpack.c.l.b16 %v350
        %v390 = vunpack.c.l.b16 %v351
        %v391 = vunpack.c.l.b16 %v352
        %v392 = vunpack.c.l.b16 %v353
        %v393 = vunpack.c.l.b16 %v354
        %v394 = vunpack.c.l.b16 %v355
        %v395 = vunpack.c.l.b16 %v356
        %v396 = vunpack.c.l.b16 %v357
        %v397 = vunpack.c.l.b16 %v358
        %v398 = vpack.c.b16 %v383, %v382
        %v399 = vpack.c.b16 %v385, %v384
        %v400 = vpack.c.b16 %v387, %v386
        %v401 = vpack.c.b16 %v389, %v388
        %v402 = vpack.c.b16 %v391, %v390
        %v403 = vpack.c.b16 %v393, %v392
        %v404 = vpack.c.b16 %v395, %v394
        %v405 = vpack.c.b16 %v397, %v396
        %414 = vmatprep.subr.bf16.mxu0 0
        %415 = vmatpush1.bf16.msra.mxu0 %v398
        %416 = vmatprep.subr.bf16.mxu0 0
        %417 = vmatpush1.bf16.msra.mxu0 %v399
        %418 = vmatprep.subr.bf16.mxu0 0
        %419 = vmatpush1.bf16.msra.mxu0 %v400
        %420 = vmatprep.subr.bf16.mxu0 0
        %421 = vmatpush1.bf16.msra.mxu0 %v401
        %422 = vmatprep.subr.bf16.mxu0 0
        %423 = vmatpush1.bf16.msra.mxu0 %v402
        %424 = vmatprep.subr.bf16.mxu0 0
        %425 = vmatpush1.bf16.msra.mxu0 %v403
        %426 = vmatprep.subr.bf16.mxu0 0
        %427 = vmatpush1.bf16.msra.mxu0 %v404
        %428 = vmatprep.subr.bf16.mxu0 0
        %429 = vmatpush1.bf16.msra.mxu0 %v405
        %430 = vmatprep.subr.bf16.mxu0 0
        %431 = vmatpush1.bf16.msra.mxu0 0
        %432 = vmatprep.subr.bf16.mxu0 0
        %433 = vmatpush1.bf16.msra.mxu0 0
        %434 = vmatprep.subr.bf16.mxu0 0
        %435 = vmatpush1.bf16.msra.mxu0 0
        %436 = vmatprep.subr.bf16.mxu0 0
        %437 = vmatpush1.bf16.msra.mxu0 0
        %438 = vmatprep.subr.bf16.mxu0 0
        %439 = vmatpush1.bf16.msra.mxu0 0
        %440 = vmatprep.subr.bf16.mxu0 0
        %441 = vmatpush1.bf16.msra.mxu0 0
        %442 = vmatprep.subr.bf16.mxu0 0
        %443 = vmatpush1.bf16.msra.mxu0 0
        %444 = vmatprep.subr.bf16.mxu0 0
        %445 = vmatpush1.bf16.msra.mxu0 0
        %446 = vmatprep.mubr.bf16.mxu0 0
        %447 = vmatmul.mubr.bf16.gmra.mrb[0].mxu0 %v360
        %v448 = vpop.f32.mrb[0].mxu0
        %v449 = vadd.f32 %v365, %v448
        %v450 = vpop.f32.mrb[0].mxu0
        %v451 = vpop.f32.mrb[0].mxu0
        %v452 = vadd.f32 %v365, %v451
        %v453 = vpop.f32.mrb[0].mxu0
        %454 = vmatprep.mubr.bf16.mxu0 0
        %455 = vmatmul.mubr.bf16.gmra.mrb[0].mxu0 %v361
        %v456 = vpop.f32.mrb[0].mxu0
        %v457 = vadd.f32 %v365, %v456
        %v458 = vpop.f32.mrb[0].mxu0
        %v459 = vpop.f32.mrb[0].mxu0
        %v460 = vadd.f32 %v365, %v459
        %v461 = vpop.f32.mrb[0].mxu0
        %462 = vdwg.mxu0
        %v463 = vmax.f32 %v449, 0.0
        %v464 = vmax.f32 %v452, 0.0
        %v465 = vmax.f32 %v457, 0.0
        %v466 = vmax.f32 %v460, 0.0
        %v467 = vld [vmem:[#allocation2 + $0xa0] sm:$0xff]
        %v468 = vld [vmem:[#allocation2 + $0xa8] sm:$0xff]
        %v469 = vld [vmem:[#allocation2 + $0xb0] sm:$0xff]
        %v470 = vld [vmem:[#allocation2 + $0xb8] sm:$0xff]
        %v471 = vld [vmem:[#allocation2 + $0xc0] sm:$0xff]
        %v472 = vld [vmem:[#allocation2 + $0xc8] sm:$0xff]
        %v473 = vld [vmem:[#allocation2 + $0xd0] sm:$0xff]
        %v474 = vld [vmem:[#allocation2 + $0xd8] sm:$0xff]
        %v475 = vld [vmem:[#allocation2 + $0xe0] sm:$0xff]
        %v476 = vld [vmem:[#allocation2 + $0xe8] sm:$0xff]
        %v477 = vld [vmem:[#allocation2 + $0xf0] sm:$0xff]
        %v478 = vld [vmem:[#allocation2 + $0xf8] sm:$0xff]
        %v479 = vld [vmem:[#allocation2 + $0x100] sm:$0xff]
        %v480 = vld [vmem:[#allocation2 + $0x108] sm:$0xff]
        %v481 = vld [vmem:[#allocation2 + $0x110] sm:$0xff]
        %v482 = vld [vmem:[#allocation2 + $0x118] sm:$0xff]
        %s483 = scalar_lea.vmem %s2, 2
        %v484 = vld [vmem:[%s483] ss:$4 sm:$0x3]
        %v485 = vpack.c.bf16 %v464, %v463
        %v486 = vpack.c.bf16 %v466, %v465
        %v488 = vlaneseq
        %v489 = vshrl.u32 %v488, 7
        %v490 = vsub.s32 0, %v489
        %v491 = vrot.slane %v484, %v490
        %v492 = vlaneseq
        %v493 = vshrl.u32 %v492, 7
        %v494 = vsub.s32 1, %v493
        %v495 = vrot.slane %v484, %v494
        %v514 = vunpack.c.l.b16 %v467
        %v515 = vunpack.c.h.b16 %v467
        %v516 = vunpack.c.l.b16 %v468
        %v517 = vunpack.c.h.b16 %v468
        %v518 = vunpack.c.l.b16 %v469
        %v519 = vunpack.c.h.b16 %v469
        %v520 = vunpack.c.l.b16 %v470
        %v521 = vunpack.c.h.b16 %v470
        %v522 = vunpack.c.l.b16 %v471
        %v523 = vunpack.c.h.b16 %v471
        %v524 = vunpack.c.l.b16 %v472
        %v525 = vunpack.c.h.b16 %v472
        %v526 = vunpack.c.l.b16 %v473
        %v527 = vunpack.c.h.b16 %v473
        %v528 = vunpack.c.l.b16 %v474
        %v529 = vunpack.c.h.b16 %v474
        %v530 = vunpack.c.l.b16 %v475
        %v531 = vunpack.c.h.b16 %v475
        %v532 = vunpack.c.l.b16 %v476
        %v533 = vunpack.c.h.b16 %v476
        %v534 = vunpack.c.l.b16 %v477
        %v535 = vunpack.c.h.b16 %v477
        %v536 = vunpack.c.l.b16 %v478
        %v537 = vunpack.c.h.b16 %v478
        %v538 = vunpack.c.l.b16 %v479
        %v539 = vunpack.c.h.b16 %v479
        %v540 = vunpack.c.l.b16 %v480
        %v541 = vunpack.c.h.b16 %v480
        %v542 = vunpack.c.l.b16 %v481
        %v543 = vunpack.c.h.b16 %v481
        %v544 = vunpack.c.l.b16 %v482
        %v545 = vunpack.c.h.b16 %v482
        %v546 = vpack.c.b16 %v516, %v514
        %v547 = vpack.c.b16 %v517, %v515
        %v548 = vpack.c.b16 %v520, %v518
        %v549 = vpack.c.b16 %v521, %v519
        %v550 = vpack.c.b16 %v524, %v522
        %v551 = vpack.c.b16 %v525, %v523
        %v552 = vpack.c.b16 %v528, %v526
        %v553 = vpack.c.b16 %v529, %v527
        %v554 = vpack.c.b16 %v532, %v530
        %v555 = vpack.c.b16 %v533, %v531
        %v556 = vpack.c.b16 %v536, %v534
        %v557 = vpack.c.b16 %v537, %v535
        %v558 = vpack.c.b16 %v540, %v538
        %v559 = vpack.c.b16 %v541, %v539
        %v560 = vpack.c.b16 %v544, %v542
        %v561 = vpack.c.b16 %v545, %v543
        %578 = vmatprep.subr.bf16.mxu0 %v547
        %579 = vmatpush1.bf16.msra.mxu0 %v546
        %580 = vmatprep.subr.bf16.mxu0 %v549
        %581 = vmatpush1.bf16.msra.mxu0 %v548
        %582 = vmatprep.subr.bf16.mxu0 %v551
        %583 = vmatpush1.bf16.msra.mxu0 %v550
        %584 = vmatprep.subr.bf16.mxu0 %v553
        %585 = vmatpush1.bf16.msra.mxu0 %v552
        %586 = vmatprep.subr.bf16.mxu0 %v555
        %587 = vmatpush1.bf16.msra.mxu0 %v554
        %588 = vmatprep.subr.bf16.mxu0 %v557
        %589 = vmatpush1.bf16.msra.mxu0 %v556
        %590 = vmatprep.subr.bf16.mxu0 %v559
        %591 = vmatpush1.bf16.msra.mxu0 %v558
        %592 = vmatprep.subr.bf16.mxu0 %v561
        %593 = vmatpush1.bf16.msra.mxu0 %v560
        %594 = vmatprep.subr.bf16.mxu0 0
        %595 = vmatpush1.bf16.msra.mxu0 0
        %596 = vmatprep.subr.bf16.mxu0 0
        %597 = vmatpush1.bf16.msra.mxu0 0
        %598 = vmatprep.subr.bf16.mxu0 0
        %599 = vmatpush1.bf16.msra.mxu0 0
        %600 = vmatprep.subr.bf16.mxu0 0
        %601 = vmatpush1.bf16.msra.mxu0 0
        %602 = vmatprep.subr.bf16.mxu0 0
        %603 = vmatpush1.bf16.msra.mxu0 0
        %604 = vmatprep.subr.bf16.mxu0 0
        %605 = vmatpush1.bf16.msra.mxu0 0
        %606 = vmatprep.subr.bf16.mxu0 0
        %607 = vmatpush1.bf16.msra.mxu0 0
        %608 = vmatprep.subr.bf16.mxu0 0
        %609 = vmatpush1.bf16.msra.mxu0 0
        %610 = vmatprep.mubr.bf16.mxu0 0
        %611 = vmatmul.mubr.bf16.gmra.mrb[0].mxu0 %v485
        %v612 = vpop.f32.mrb[0].mxu0
        %v613 = vadd.f32 %v491, %v612
        %v614 = vpop.f32.mrb[0].mxu0
        %v615 = vadd.f32 %v495, %v614
        %v616 = vpop.f32.mrb[0].mxu0
        %v617 = vadd.f32 %v491, %v616
        %v618 = vpop.f32.mrb[0].mxu0
        %v619 = vadd.f32 %v495, %v618
        %620 = vmatprep.mubr.bf16.mxu0 0
        %621 = vmatmul.mubr.bf16.gmra.mrb[0].mxu0 %v486
        %v622 = vpop.f32.mrb[0].mxu0
        %v623 = vadd.f32 %v491, %v622
        %v624 = vpop.f32.mrb[0].mxu0
        %v625 = vadd.f32 %v495, %v624
        %v626 = vpop.f32.mrb[0].mxu0
        %v627 = vadd.f32 %v491, %v626
        %v628 = vpop.f32.mrb[0].mxu0
        %v629 = vadd.f32 %v495, %v628
        %630 = vdwg.mxu0
        %v631 = vmax.f32 %v613, 0.0
        %v632 = vmax.f32 %v615, 0.0
        %v633 = vmax.f32 %v617, 0.0
        %v634 = vmax.f32 %v619, 0.0
        %v635 = vmax.f32 %v623, 0.0
        %v636 = vmax.f32 %v625, 0.0
        %v637 = vmax.f32 %v627, 0.0
        %v638 = vmax.f32 %v629, 0.0
        %v639 = vld [vmem:[#allocation2 + $0x120] sm:$0xf]
        %v640 = vld [vmem:[#allocation2 + $0x128] sm:$0xf]
        %v641 = vld [vmem:[#allocation2 + $0x130] sm:$0xf]
        %v642 = vld [vmem:[#allocation2 + $0x138] sm:$0xf]
        %v643 = vld [vmem:[#allocation2 + $0x140] sm:$0xf]
        %v644 = vld [vmem:[#allocation2 + $0x148] sm:$0xf]
        %v645 = vld [vmem:[#allocation2 + $0x150] sm:$0xf]
        %v646 = vld [vmem:[#allocation2 + $0x158] sm:$0xf]
        %v647 = vld [vmem:[#allocation2 + $0x160] sm:$0xf]
        %v648 = vld [vmem:[#allocation2 + $0x168] sm:$0xf]
        %v649 = vld [vmem:[#allocation2 + $0x170] sm:$0xf]
        %v650 = vld [vmem:[#allocation2 + $0x178] sm:$0xf]
        %v651 = vld [vmem:[#allocation2 + $0x180] sm:$0xf]
        %v652 = vld [vmem:[#allocation2 + $0x188] sm:$0xf]
        %v653 = vld [vmem:[#allocation2 + $0x190] sm:$0xf]
        %v654 = vld [vmem:[#allocation2 + $0x198] sm:$0xf]
        %v655 = vld [vmem:[#allocation2 + $0x1a0] sm:$0xf]
        %v656 = vld [vmem:[#allocation2 + $0x1a8] sm:$0xf]
        %v657 = vld [vmem:[#allocation2 + $0x1b0] sm:$0xf]
        %v658 = vld [vmem:[#allocation2 + $0x1b8] sm:$0xf]
        %v659 = vld [vmem:[#allocation2 + $0x1c0] sm:$0xf]
        %v660 = vld [vmem:[#allocation2 + $0x1c8] sm:$0xf]
        %v661 = vld [vmem:[#allocation2 + $0x1d0] sm:$0xf]
        %v662 = vld [vmem:[#allocation2 + $0x1d8] sm:$0xf]
        %v663 = vld [vmem:[#allocation2 + $0x1e0] sm:$0xf]
        %v664 = vld [vmem:[#allocation2 + $0x1e8] sm:$0xf]
        %v665 = vld [vmem:[#allocation2 + $0x1f0] sm:$0xf]
        %v666 = vld [vmem:[#allocation2 + $0x1f8] sm:$0xf]
        %v667 = vld [vmem:[#allocation2 + $0x200] sm:$0xf]
        %v668 = vld [vmem:[#allocation2 + $0x208] sm:$0xf]
        %v669 = vld [vmem:[#allocation2 + $0x210] sm:$0xf]
        %v670 = vld [vmem:[#allocation2 + $0x218] sm:$0xf]
        %v671 = vld [vmem:[%s2 + $0x3] sm:$0x1]
        %v672 = vpack.c.bf16 %v633, %v631
        %v673 = vpack.c.bf16 %v634, %v632
        %v674 = vpack.c.bf16 %v637, %v635
        %v675 = vpack.c.bf16 %v638, %v636
        %v676 = vlaneseq
        %v677 = vshrl.u32 %v676, 7
        %v678 = vsub.s32 0, %v677
        %v679 = vrot.slane %v671, %v678
        %v712 = vunpack.c.l.b16 %v639
        %v713 = vunpack.c.l.b16 %v640
        %v714 = vunpack.c.l.b16 %v641
        %v715 = vunpack.c.l.b16 %v642
        %v716 = vunpack.c.l.b16 %v643
        %v717 = vunpack.c.l.b16 %v644
        %v718 = vunpack.c.l.b16 %v645
        %v719 = vunpack.c.l.b16 %v646
        %v720 = vunpack.c.l.b16 %v647
        %v721 = vunpack.c.l.b16 %v648
        %v722 = vunpack.c.l.b16 %v649
        %v723 = vunpack.c.l.b16 %v650
        %v724 = vunpack.c.l.b16 %v651
        %v725 = vunpack.c.l.b16 %v652
        %v726 = vunpack.c.l.b16 %v653
        %v727 = vunpack.c.l.b16 %v654
        %v728 = vunpack.c.l.b16 %v655
        %v729 = vunpack.c.l.b16 %v656
        %v730 = vunpack.c.l.b16 %v657
        %v731 = vunpack.c.l.b16 %v658
        %v732 = vunpack.c.l.b16 %v659
        %v733 = vunpack.c.l.b16 %v660
        %v734 = vunpack.c.l.b16 %v661
        %v735 = vunpack.c.l.b16 %v662
        %v736 = vunpack.c.l.b16 %v663
        %v737 = vunpack.c.l.b16 %v664
        %v738 = vunpack.c.l.b16 %v665
        %v739 = vunpack.c.l.b16 %v666
        %v740 = vunpack.c.l.b16 %v667
        %v741 = vunpack.c.l.b16 %v668
        %v742 = vunpack.c.l.b16 %v669
        %v743 = vunpack.c.l.b16 %v670
        %v744 = vpack.c.b16 %v713, %v712
        %v745 = vpack.c.b16 %v715, %v714
        %v746 = vpack.c.b16 %v717, %v716
        %v747 = vpack.c.b16 %v719, %v718
        %v748 = vpack.c.b16 %v721, %v720
        %v749 = vpack.c.b16 %v723, %v722
        %v750 = vpack.c.b16 %v725, %v724
        %v751 = vpack.c.b16 %v727, %v726
        %v752 = vpack.c.b16 %v729, %v728
        %v753 = vpack.c.b16 %v731, %v730
        %v754 = vpack.c.b16 %v733, %v732
        %v755 = vpack.c.b16 %v735, %v734
        %v756 = vpack.c.b16 %v737, %v736
        %v757 = vpack.c.b16 %v739, %v738
        %v758 = vpack.c.b16 %v741, %v740
        %v759 = vpack.c.b16 %v743, %v742
        %776 = vmatprep.subr.bf16.mxu0 0
        %777 = vmatpush1.bf16.msra.mxu0 %v744
        %778 = vmatprep.subr.bf16.mxu0 0
        %779 = vmatpush1.bf16.msra.mxu0 %v745
        %780 = vmatprep.subr.bf16.mxu0 0
        %781 = vmatpush1.bf16.msra.mxu0 %v746
        %782 = vmatprep.subr.bf16.mxu0 0
        %783 = vmatpush1.bf16.msra.mxu0 %v747
        %784 = vmatprep.subr.bf16.mxu0 0
        %785 = vmatpush1.bf16.msra.mxu0 %v748
        %786 = vmatprep.subr.bf16.mxu0 0
        %787 = vmatpush1.bf16.msra.mxu0 %v749
        %788 = vmatprep.subr.bf16.mxu0 0
        %789 = vmatpush1.bf16.msra.mxu0 %v750
        %790 = vmatprep.subr.bf16.mxu0 0
        %791 = vmatpush1.bf16.msra.mxu0 %v751
        %792 = vmatprep.subr.bf16.mxu0 0
        %793 = vmatpush1.bf16.msra.mxu0 %v752
        %794 = vmatprep.subr.bf16.mxu0 0
        %795 = vmatpush1.bf16.msra.mxu0 %v753
        %796 = vmatprep.subr.bf16.mxu0 0
        %797 = vmatpush1.bf16.msra.mxu0 %v754
        %798 = vmatprep.subr.bf16.mxu0 0
        %799 = vmatpush1.bf16.msra.mxu0 %v755
        %800 = vmatprep.subr.bf16.mxu0 0
        %801 = vmatpush1.bf16.msra.mxu0 %v756
        %802 = vmatprep.subr.bf16.mxu0 0
        %803 = vmatpush1.bf16.msra.mxu0 %v757
        %804 = vmatprep.subr.bf16.mxu0 0
        %805 = vmatpush1.bf16.msra.mxu0 %v758
        %806 = vmatprep.subr.bf16.mxu0 0
        %807 = vmatpush1.bf16.msra.mxu0 %v759
        %808 = vmatprep.mubr.bf16.mxu0 %v673
        %809 = vmatmul.mubr.bf16.gmra.mrb[0].mxu0 %v672
        %v810 = vpop.f32.mrb[0].mxu0
        %v811 = vadd.f32 %v679, %v810
        %v812 = vpop.f32.mrb[0].mxu0
        %v813 = vpop.f32.mrb[0].mxu0
        %v814 = vadd.f32 %v679, %v813
        %v815 = vpop.f32.mrb[0].mxu0
        %816 = vmatprep.mubr.bf16.mxu0 %v675
        %817 = vmatmul.mubr.bf16.gmra.mrb[0].mxu0 %v674
        %v818 = vpop.f32.mrb[0].mxu0
        %v819 = vadd.f32 %v679, %v818
        %v820 = vpop.f32.mrb[0].mxu0
        %v821 = vpop.f32.mrb[0].mxu0
        %v822 = vadd.f32 %v679, %v821
        %v823 = vpop.f32.mrb[0].mxu0
        %824 = vdwg.mxu0
        %v825 = vlaneseq
        %v826 = vand.u32 %v825, 127
        %v827 = vlaneseq
        %v828 = vshrl.u32 %v827, 7
        %v829 = vadd.s32 %v828, 8
        %v830 = vadd.s32 %v828, 16
        %v831 = vadd.s32 %v828, 24
        %s832 = smul.u32 %s20, 32
        %v833 = vstv %s832
        %v834 = vadd.s32 %v828, %v833
        %v835 = vadd.s32 %v829, %v833
        %v836 = vadd.s32 %v830, %v833
        %v837 = vadd.s32 %v831, %v833
        %vm838 = vcmp.lt.s32.totalorder %v826, 8
        %vm839 = vcmp.lt.s32.totalorder %v834, 48
        %vm840 = vcmp.lt.s32.totalorder %v835, 48
        %vm841 = vcmp.lt.s32.totalorder %v836, 48
        %vm842 = vcmp.lt.s32.totalorder %v837, 48
        %vm843 = vmand %vm838, %vm839
        %vm844 = vmand %vm838, %vm840
        %vm845 = vmand %vm838, %vm841
        %vm846 = vmand %vm838, %vm842
        %v847 = vsel %vm843, %v811, 0.0
        %v848 = vsel %vm844, %v814, 0.0
        %v849 = vsel %vm845, %v819, 0.0
        %v850 = vsel %vm846, %v822, 0.0
        %v851 = vadd.f32 %v847, %v848
        %v852 = vadd.f32 %v851, %v849
        %v853 = vadd.f32 %v852, %v850
        %854 = vadd.xlane.f32.xlu0 %v853
        %v855 = vpop.xlane.xlu0 %854
        %v856 = vrot.slane %v855, 4
        %v857 = vadd.f32 %v855, %v856
        %v858 = vrot.slane %v857, 2
        %v859 = vadd.f32 %v857, %v858
        %v860 = vrot.slane %v859, 1
        %v861 = vadd.f32 %v859, %v860
        %s862 = vtos %v861
        %864 = vset.pattern.permute.xlu0 127
        %865 = vperm.xlu0 %864, %v811
        %v866 = vpop.permute.xlu0 %865
        %869 = vset.pattern.permute.xlu0 127
        %870 = vperm.xlu0 %869, %v814
        %v871 = vpop.permute.xlu0 %870
        %874 = vset.pattern.permute.xlu0 127
        %875 = vperm.xlu0 %874, %v819
        %v876 = vpop.permute.xlu0 %875
        %879 = vset.pattern.permute.xlu0 127
        %880 = vperm.xlu0 %879, %v822
        %v881 = vpop.permute.xlu0 %880
        %v883 = vadd.f32 %v866, %v811
        %v884 = vadd.f32 %v871, %v814
        %v885 = vadd.f32 %v876, %v819
        %v886 = vadd.f32 %v881, %v822
        %v887 = vpack.c.bf16 %v884, %v883
        %v888 = vpack.c.bf16 %v886, %v885
        %v891 = vunpack.c.l.b16 %v887
        %v892 = vunpack.c.h.b16 %v887
        %v893 = vunpack.c.l.b16 %v888
        %v894 = vunpack.c.h.b16 %v888
        %v895 = vpack.c.b16 %v891, %v891
        %v896 = vpack.c.b16 %v892, %v892
        %v897 = vpack.c.b16 %v893, %v893
        %v898 = vpack.c.b16 %v894, %v894
        %903 = vst [vmem:[%s219] sm:$0xf] %v895
        %904 = vst [vmem:[%s219 + $0x4] sm:$0xf] %v896
        %905 = vst [vmem:[%s219 + $0x8] sm:$0xf] %v897
        %906 = vst [vmem:[%s219 + $0xc] sm:$0xf] %v898
        %v907 = vstv %s862
        %vm908 = vcmask 0
        %909 = vst.msk [vmem:[%s246] sm:$0x1] %vm908, %v907
        %s910 = sand.u32 %s96, 1
        %s911 = scalar_lea.sflag [#allocation4], %s910
        %s912 = sand.u32 %s96, 1
        %s913 = smul.addr %s912, 16
        %s914 = scalar_lea.vmem [#allocation5], %s913
        %p915 = scmp.lt.s32.totalorder %s20, 1
        %s916 = scalar_select %p915, %s20, 1
        %s917 = scalar_lea.vmem %s4, %s916
        // Predicated region
        $region37: #{tpu_custom_call.1} parent=31 // pred_check
          %p918 = pneg %p106
        $region38: #{tpu_custom_call.1} parent=31 // pred_check_branch
          %920 = sbr.rel (%p918) target = $region40
        $region39: #{tpu_custom_call.1} parent=31 // pred_region
          %s921 = smul.u32 4, %s20
          %s922 = ssub.s32 6, %s921
          %p923 = scmp.lt.s32.totalorder %s922, 4
          %s924 = scalar_select %p923, %s922, 4
          %s925 = smul.u32 64, %s924
          %s927 = ssub.s32 256, %s925
          %928 = vsyncadd %s911, %s927
          %p929 = scmp.ne.s32.totalorder 0, %s925
          %s930 = smul.addr %s921, 64
          %s931 = scalar_lea.hbm %s3, %s930
          %s932 = smul.u32 4, %s924
          %s933 = sshll.u32 %s914, 4
          %s934 = int_to_ptr.vmem [resolvable:$true] %s933
          %s935 = sshll.u32 %s932, 4
          %939 = dma.vmem_to_hbm [thread:$0]  (%p929), %s934, %s935, %s931, %s911, 64, 64, 4
        $region40: #{tpu_custom_call.1} parent=31 // pred_fallthru
          _
        // Predicated region
        $region41: #{tpu_custom_call.1} parent=31 // pred_check
          %p940 = pneg %p132
        $region42: #{tpu_custom_call.1} parent=31 // pred_check_branch
          %942 = sbr.rel (%p940) target = $region44
        $region43: #{tpu_custom_call.1} parent=31 // pred_region
          _
        $region44: #{tpu_custom_call.1} parent=31 // pred_fallthru
          _
      $region32: #{tpu_custom_call.1} parent=5 // pred_fallthru
        _
      %p943 = scmp.le.s32.totalorder 2, %s15
      // Predicated region
      $region45: #{tpu_custom_call.1} parent=5 // pred_check
        %p944 = pneg %p943
      $region46: #{tpu_custom_call.1} parent=5 // pred_check_branch
        %946 = sbr.rel (%p944) target = $region48
      $region47: #{tpu_custom_call.1} parent=5 // pred_region
        %s947 = ssub.s32 %s15, 2
        // Predicated region
        $region49: #{tpu_custom_call.1} parent=47 // pred_check
          %p948 = pneg %p112
        $region50: #{tpu_custom_call.1} parent=47 // pred_check_branch
          %950 = sbr.rel (%p948) target = $region52
        $region51: #{tpu_custom_call.1} parent=47 // pred_region
          %s951 = sand.u32 %s97, 1
          %s952 = scalar_lea.sflag [#allocation4], %s951
          %s953 = sand.u32 %s97, 1
          %s954 = smul.addr %s953, 16
          %s955 = scalar_lea.vmem [#allocation5], %s954
          %956 = dma.done %s952, 256
        $region52: #{tpu_custom_call.1} parent=47 // pred_fallthru
          _
        // Predicated region
        $region53: #{tpu_custom_call.1} parent=47 // pred_check
          %p957 = pneg %p138
        $region54: #{tpu_custom_call.1} parent=47 // pred_check_branch
          %959 = sbr.rel (%p957) target = $region56
        $region55: #{tpu_custom_call.1} parent=47 // pred_region
          %p960 = scmp.lt.s32.totalorder %s21, 1
          %s961 = scalar_select %p960, %s21, 1
          %s962 = scalar_lea.vmem %s4, %s961
        $region56: #{tpu_custom_call.1} parent=47 // pred_fallthru
          _
      $region48: #{tpu_custom_call.1} parent=5 // pred_fallthru
        _
    $region6: #{tpu_custom_call.1} parent=1 // loop_footer
      %s19 = sadd.s32 1, %s15
    $region7: #{tpu_custom_call.1} parent=1 // loop_footer_branch
      %14 = sbr.rel target = $region3
    $region8: #{tpu_custom_call.1} parent=1 // loop_exit
      _
    %963 = vsyncpa [#allocation3], 1
    %s964 = scalar_lea.sflag [#allocation3], 1
    %965 = vsyncpa %s964, 1
    %966 = vsyncpa [#allocation4], 1
    %s967 = scalar_lea.sflag [#allocation4], 1
    %968 = vsyncpa %s967, 1

</llo_original>
